<compile_context>
chip_gen: v7x
topology: tpu7x:2x2x1
jax: 0.10.0
libtpu: 0.0.40
codegen_flags: <defaults>
</compile_context>

<pallas_src>
import functools

import jax
import jax.numpy as jnp
from jax.experimental import pallas as pl
from jax.experimental.pallas import tpu as pltpu


# ----------------------------------------------------------------------------
# BlockSpec helpers
# ----------------------------------------------------------------------------
def _const_spec(block_shape, index_map):
    """Spec for an operand whose index_map is constant across the grid.

    Single-buffer it so the auto-pipeliner does not allocate two VMEM copies
    of the block (matters most for the banded weight on v7x's 64 MiB VMEM).
    Falls back to a plain BlockSpec on builds without pipeline_mode support.
    """
    try:
        return pl.BlockSpec(block_shape, index_map,
                            pipeline_mode=pl.Buffered(1))
    except (TypeError, AttributeError):
        return pl.BlockSpec(block_shape, index_map)


# ----------------------------------------------------------------------------
# Kernels
# ----------------------------------------------------------------------------
def _conv_body(x_ref, w_ref, scale_ref, shift_ref, y_ref, s_ref, ss_ref, *,
               B, H, WCin, WCout, circular, mxu_dtype):
    """One lane-dense activation block (B images).

    x_ref   : (B, H, W*Cin)      activation block
    w_ref   : (3, W*Cin, W*Cout) banded conv weights (kw taps + W padding folded)
    scale_ref/shift_ref : (1, W*Cin) folded previous-BN affine (or None)
    y_ref   : (B, H, W*Cout)     conv output (pre-BN), lane-dense store
    s_ref   : (1, 1, W*Cout)     per-lane sum over (B, H) rows   (f32)
    ss_ref  : (1, 1, W*Cout)     per-lane sum of squares (f32)
    """
    if scale_ref is not None:
        # Previous layer's BatchNorm affine + ReLU fused into this conv's
        # input read.  VPU math in f32 (v5e has no native bf16 VPU); only the
        # MXU operands are cast down.
        x = x_ref[...].astype(jnp.float32)
        x = jnp.maximum(x * scale_ref[...] + shift_ref[...], 0.0)
        xb = x.astype(mxu_dtype)
    else:
        xb = x_ref[...].astype(mxu_dtype)                       # (B, H, WCin)

    # H-direction halo rows (the W halo already lives in the banded weight).
    if circular:
        top = xb[:, H - 1:H, :]
        bot = xb[:, 0:1, :]
    else:
        top = jnp.zeros((B, 1, WCin), mxu_dtype)
        bot = jnp.zeros((B, 1, WCin), mxu_dtype)
    lhs0 = jnp.concatenate([top, xb[:, :H - 1, :]], axis=1)     # row h -> x[h-1]
    lhs2 = jnp.concatenate([xb[:, 1:, :], bot], axis=1)         # row h -> x[h+1]

    # 3 MXU matmuls (one per kh tap): (B*H, W*Cin) x (W*Cin, W*Cout), f32 acc.
    acc = jnp.dot(lhs0.reshape(B * H, WCin), w_ref[0],
                  preferred_element_type=jnp.float32)
    acc = acc + jnp.dot(xb.reshape(B * H, WCin), w_ref[1],
                        preferred_element_type=jnp.float32)
    acc = acc + jnp.dot(lhs2.reshape(B * H, WCin), w_ref[2],
                        preferred_element_type=jnp.float32)

    y_ref[...] = acc.reshape(B, H, WCout).astype(y_ref.dtype)   # lane-dense vst
    # Batch-norm statistics fused into the conv, computed from the f32
    # accumulator (pre-rounding): per-lane (W*Cout) partial sums, reduced to
    # per-channel in the tiny wrapper.
    s_ref[...] = jnp.sum(acc, axis=0).reshape(1, 1, WCout)
    ss_ref[...] = jnp.sum(acc * acc, axis=0).reshape(1, 1, WCout)


def _make_conv_kernel(B, H, WCin, WCout, *, circular, fuse_affine, mxu_dtype):
    body = functools.partial(_conv_body, B=B, H=H, WCin=WCin, WCout=WCout,
                             circular=circular, mxu_dtype=mxu_dtype)
    if fuse_affine:
        def kernel(x_ref, w_ref, scale_ref, shift_ref, y_ref, s_ref, ss_ref):
            body(x_ref, w_ref, scale_ref, shift_ref, y_ref, s_ref, ss_ref)
    else:
        def kernel(x_ref, w_ref, y_ref, s_ref, ss_ref):
            body(x_ref, w_ref, None, None, y_ref, s_ref, ss_ref)
    return kernel


def _bn_relu_kernel(y_ref, scale_ref, shift_ref, o_ref):
    """Final fused per-channel affine (folded batch-norm) + ReLU, lane-dense."""
    y = y_ref[...].astype(jnp.float32)                          # (B, H, W*C)
    o_ref[...] = jnp.maximum(y * scale_ref[...] + shift_ref[...], 0.0
                             ).astype(o_ref.dtype)


# ----------------------------------------------------------------------------
# Wrappers
# ----------------------------------------------------------------------------
def _banded_weights(w_hwio, W, circular, dtype):
    """Fold the kw taps and the W-direction padding into a block-banded matrix.

    Returns (3, W*Cin, W*Cout) such that
      out[h, w*Cout+co] = sum_kh  x_row[h+kh-1, :] @ big[kh]
    reproduces the 3x3 conv with 'zeros' (band clipped) or 'circular'
    (band wrapped) padding along W.
    """
    _, _, Cin, Cout = w_hwio.shape
    src = jnp.arange(W)[None, :, None]                          # (1, Wsrc, 1)
    dst = jnp.arange(W)[None, None, :]                          # (1, 1, Wdst)
    kw = jnp.arange(3)[:, None, None]                           # (3, 1, 1)
    tgt = dst + kw - 1
    if circular:
        tgt = tgt % W
    # zeros mode: out-of-range targets never match a source row -> zero band.
    sel = (src == tgt).astype(w_hwio.dtype)                     # (3, Wsrc, Wdst)
    big = jnp.einsum('ksw,hkio->hsiwo', sel, w_hwio)            # (3,W,Cin,W,Cout)
    return big.reshape(3, W * Cin, W * Cout).astype(dtype)


def _conv_layer(x_flat, big_w, *, H, W, Cin, Cout, circular, mxu_dtype,
                act_dtype, batch_block, in_scale=None, in_shift=None):
    """Conv3x3 (+ optionally fused previous-BN affine+ReLU on the input) and
    fused batch-statistic partial sums.  x_flat: (N, H, W*Cin) lane-dense."""
    N = x_flat.shape[0]
    WCin, WCout = W * Cin, W * Cout
    B = batch_block
    nG = N // B
    fuse_affine = in_scale is not None
    kernel = _make_conv_kernel(B, H, WCin, WCout, circular=circular,
                               fuse_affine=fuse_affine, mxu_dtype=mxu_dtype)

    in_specs = [pl.BlockSpec((B, H, WCin), lambda g: (g, 0, 0)),
                _const_spec((3, WCin, WCout), lambda g: (0, 0, 0))]
    args = [x_flat, big_w]
    if fuse_affine:
        in_specs += [_const_spec((1, WCin), lambda g: (0, 0)),
                     _const_spec((1, WCin), lambda g: (0, 0))]
        args += [in_scale.astype(jnp.float32), in_shift.astype(jnp.float32)]

    esize = lambda dt: jnp.dtype(dt).itemsize
    flops = 2 * 3 * N * H * WCin * WCout
    bytes_accessed = (N * H * WCin * esize(x_flat.dtype)
                      + 3 * WCin * WCout * esize(big_w.dtype)
                      + N * H * WCout * esize(act_dtype)
                      + 2 * nG * WCout * 4
                      + (2 * WCin * 4 if fuse_affine else 0))

    y, s, ss = pl.pallas_call(
        kernel,
        out_shape=(jax.ShapeDtypeStruct((N, H, WCout), act_dtype),
                   jax.ShapeDtypeStruct((nG, 1, WCout), jnp.float32),
                   jax.ShapeDtypeStruct((nG, 1, WCout), jnp.float32)),
        grid=(nG,),
        in_specs=in_specs,
        out_specs=(pl.BlockSpec((B, H, WCout), lambda g: (g, 0, 0)),
                   pl.BlockSpec((1, 1, WCout), lambda g: (g, 0, 0)),
                   pl.BlockSpec((1, 1, WCout), lambda g: (g, 0, 0))),
        compiler_params=pltpu.CompilerParams(
            dimension_semantics=("parallel",)),
        cost_estimate=pl.CostEstimate(flops=flops, transcendentals=0,
                                      bytes_accessed=bytes_accessed),
    )(*args)
    return y, s, ss


def _bn_scale_shift(s, ss, gamma, beta, *, count, W, C, eps):
    """Tiny per-channel scalar math: reduce lane-dense partial sums to
    per-channel mean/var and fold gamma/beta into a single affine."""
    s_c = s.sum(axis=(0, 1)).reshape(W, C).sum(axis=0)          # (C,)
    ss_c = ss.sum(axis=(0, 1)).reshape(W, C).sum(axis=0)        # (C,)
    mean = s_c / count
    # Biased (train-mode) variance, clamped at 0 against cancellation.
    var = jnp.maximum(ss_c / count - mean * mean, 0.0)
    scale = gamma.astype(jnp.float32) * jax.lax.rsqrt(var + eps)
    shift = beta.astype(jnp.float32) - mean * scale
    return scale, shift


def _bn_relu(y_flat, scale_row, shift_row, *, batch_block,
             out_dtype=jnp.float32):
    """Standalone lane-dense affine + ReLU (used only for the final BN)."""
    N, H, WC = y_flat.shape
    B = batch_block
    nG = N // B
    return pl.pallas_call(
        _bn_relu_kernel,
        out_shape=jax.ShapeDtypeStruct((N, H, WC), out_dtype),
        grid=(nG,),
        in_specs=[pl.BlockSpec((B, H, WC), lambda g: (g, 0, 0)),
                  _const_spec((1, WC), lambda g: (0, 0)),
                  _const_spec((1, WC), lambda g: (0, 0))],
        out_specs=pl.BlockSpec((B, H, WC), lambda g: (g, 0, 0)),
        compiler_params=pltpu.CompilerParams(
            dimension_semantics=("parallel",)),
    )(y_flat, scale_row, shift_row)


def init_conv_block_params(key, ch_in, ch_out):
    """Deterministic synthetic init (shapes match nn.Conv2d / nn.BatchNorm2d).
    Conv biases are kept (used by the reference) but are a no-op before
    train-mode BatchNorm, so the kernels never read them."""
    k1, k2, k3, k4 = jax.random.split(key, 4)
    bound1 = 1.0 / jnp.sqrt(ch_in * 9.0)
    bound2 = 1.0 / jnp.sqrt(ch_out * 9.0)
    return {
        "w1": jax.random.uniform(k1, (3, 3, ch_in, ch_out), jnp.float32, -bound1, bound1),
        "b1": jax.random.uniform(k2, (ch_out,), jnp.float32, -bound1, bound1),
        "g1": jnp.ones((ch_out,), jnp.float32),
        "be1": jnp.zeros((ch_out,), jnp.float32),
        "w2": jax.random.uniform(k3, (3, 3, ch_out, ch_out), jnp.float32, -bound2, bound2),
        "b2": jax.random.uniform(k4, (ch_out,), jnp.float32, -bound2, bound2),
        "g2": jnp.ones((ch_out,), jnp.float32),
        "be2": jnp.zeros((ch_out,), jnp.float32),
    }


def conv_block_forward_nhwc(params, x_nhwc, *, circular_padding=False,
                            eps=1e-5, mxu_dtype=jnp.bfloat16, act_dtype=None,
                            batch_block=None):
    """conv3x3 -> BN -> ReLU -> conv3x3 -> BN -> ReLU, lane-dense NHWC in/out.

    Per the PyTorch spec, only the first conv honors circular_padding; the
    second conv always uses zero padding.  This is the production entry point
    (no NCHW<->lane-dense transpose passes)."""
    N, H, W, Cin = x_nhwc.shape
    Cout = params["w1"].shape[-1]
    if act_dtype is None:
        act_dtype = mxu_dtype          # bf16 intermediates on the bf16 path
    if batch_block is None:
        # Fill the MXU M dimension (target ~256 rows per matmul) while
        # splitting N evenly across grid steps.
        batch_block = min(N, max(1, -(-256 // H)))
        while N % batch_block:
            batch_block -= 1
    cnt = float(N * H * W)

    x = x_nhwc.reshape(N, H, W * Cin)                 # lane-dense view (free)
    big_w1 = _banded_weights(params["w1"], W, circular_padding, mxu_dtype)
    big_w2 = _banded_weights(params["w2"], W, False, mxu_dtype)

    # Layer 1: conv (+ fused batch-statistic partial sums).
    y1, s1, ss1 = _conv_layer(x, big_w1, H=H, W=W, Cin=Cin, Cout=Cout,
                              circular=circular_padding, mxu_dtype=mxu_dtype,
                              act_dtype=act_dtype, batch_block=batch_block)
    scale1, shift1 = _bn_scale_shift(s1, ss1, params["g1"], params["be1"],
                                     count=cnt, W=W, C=Cout, eps=eps)

    # Layer 2: BN1 affine + ReLU fused into conv2's input read, conv + stats.
    y2, s2, ss2 = _conv_layer(
        y1, big_w2, H=H, W=W, Cin=Cout, Cout=Cout, circular=False,
        mxu_dtype=mxu_dtype, act_dtype=act_dtype, batch_block=batch_block,
        in_scale=jnp.tile(scale1, W).reshape(1, W * Cout),
        in_shift=jnp.tile(shift1, W).reshape(1, W * Cout))
    scale2, shift2 = _bn_scale_shift(s2, ss2, params["g2"], params["be2"],
                                     count=cnt, W=W, C=Cout, eps=eps)

    # Final BN2 affine + ReLU (single lane-dense elementwise pass, f32 out).
    out = _bn_relu(y2,
                   jnp.tile(scale2, W).reshape(1, W * Cout),
                   jnp.tile(shift2, W).reshape(1, W * Cout),
                   batch_block=batch_block)
    return out.reshape(N, H, W, Cout)


def conv_block_forward(params, x_nchw, **kwargs):
    """NCHW convenience wrapper matching the PyTorch interface.  The two
    transposes are outside the Pallas hot path; production callers should use
    conv_block_forward_nhwc directly."""
    out = conv_block_forward_nhwc(params, jnp.transpose(x_nchw, (0, 2, 3, 1)),
                                  **kwargs)
    return jnp.transpose(out, (0, 3, 1, 2))


# ----------------------------------------------------------------------------
# Pure-JAX reference (includes the conv biases, which the kernels drop —
# they must still match because of train-mode BatchNorm).
# ----------------------------------------------------------------------------
def _ref_forward(params, x_nchw, *, circular_padding=False, eps=1e-5):
    x = jnp.transpose(x_nchw, (0, 2, 3, 1))
    dn = jax.lax.conv_dimension_numbers(x.shape, params["w1"].shape,
                                        ("NHWC", "HWIO", "NHWC"))

    def conv(x, w, b, circular):
        xp = jnp.pad(x, ((0, 0), (1, 1), (1, 1), (0, 0)),
                     mode="wrap" if circular else "constant")
        y = jax.lax.conv_general_dilated(xp, w, (1, 1), "VALID",
                                         dimension_numbers=dn)
        return y + b

    def bn_relu_ref(y, g, b):
        mean = jnp.mean(y, axis=(0, 1, 2))
        var = jnp.mean((y - mean) ** 2, axis=(0, 1, 2))
        return jnp.maximum((y - mean) / jnp.sqrt(var + eps) * g + b, 0.0)

    y = conv(x, params["w1"], params["b1"], circular_padding)
    y = bn_relu_ref(y, params["g1"], params["be1"])
    y = conv(y, params["w2"], params["b2"], False)
    y = bn_relu_ref(y, params["g2"], params["be2"])
    return jnp.transpose(y, (0, 3, 1, 2))


if __name__ == "__main__":
    key = jax.random.PRNGKey(0)
    kx, kp = jax.random.split(key)

    N, ch_in, ch_out, H, W = 2, 4, 8, 16, 16
    x = jax.random.normal(kx, (N, ch_in, H, W), jnp.float32)
    params = init_conv_block_params(kp, ch_in, ch_out)

    # Strict f32 MXU / f32 intermediates path: zero and circular padding.
    for circular in (False, True):
        out = jax.block_until_ready(
            conv_block_forward(params, x, circular_padding=circular,
                               mxu_dtype=jnp.float32))
        ref = _ref_forward(params, x, circular_padding=circular)
        assert out.shape == (N, ch_out, H, W)
        assert jnp.allclose(out, ref, atol=1e-4, rtol=1e-4), \
            f"f32 mismatch vs reference (circular={circular})"

    # Default path: bf16 MXU operands + bf16 intermediates, f32 acc / BN math.
    for circular in (False, True):
        out_bf16 = jax.block_until_ready(
            conv_block_forward(params, x, circular_padding=circular))
        ref = _ref_forward(params, x, circular_padding=circular)
        assert out_bf16.shape == (N, ch_out, H, W)
        assert jnp.allclose(out_bf16, ref, atol=5e-2, rtol=5e-2), \
            f"bf16 mismatch vs reference (circular={circular})"

    print("KERNEL_OK")
</pallas_src>

<mosaic_0001>
module attributes {stable_mosaic.version = 11 : i64} {
  func.func @kernel(%arg0: i32, %arg1: memref<2x16x64xf32, #tpu.memory_space<vmem>>, %arg2: memref<3x64x128xf32, #tpu.memory_space<vmem>>, %arg3: memref<2x16x128xf32, #tpu.memory_space<vmem>>, %arg4: memref<1x1x128xf32, #tpu.memory_space<vmem>>, %arg5: memref<1x1x128xf32, #tpu.memory_space<vmem>>) attributes {dimension_semantics = [#tpu.dimension_semantics<parallel>], iteration_bounds = array<i64: 1>, scalar_prefetch = 0 : i64, scratch_operands = 0 : i64, tpu.core_type = #tpu.core_type<tc>, window_params = [{transform_indices = @transform_0, window_bounds = array<i64: 2, 16, 64>}, {pipeline_mode = #tpu.pipeline_mode<synchronous>, transform_indices = @transform_1, window_bounds = array<i64: 3, 64, 128>}, {transform_indices = @transform_2, window_bounds = array<i64: 2, 16, 128>}, {transform_indices = @transform_3, window_bounds = array<i64: 1, 1, 128>}, {transform_indices = @transform_4, window_bounds = array<i64: 1, 1, 128>}]} {
    %c0 = arith.constant 0 : index
    %c0_0 = arith.constant 0 : index
    %c0_1 = arith.constant 0 : index
    %0 = vector.load %arg1[%c0, %c0_0, %c0_1] : memref<2x16x64xf32, #tpu.memory_space<vmem>>, vector<2x16x64xf32>
    %cst = arith.constant 0.000000e+00 : f32
    %1 = vector.broadcast %cst : f32 to vector<2x1x64xf32>
    %cst_2 = arith.constant 0.000000e+00 : f32
    %2 = vector.broadcast %cst_2 : f32 to vector<2x1x64xf32>
    %3 = vector.extract_strided_slice %0 {offsets = [0, 0, 0], sizes = [2, 15, 64], strides = [1, 1, 1]} : vector<2x16x64xf32> to vector<2x15x64xf32>
    %4 = tpu.concatenate %1, %3 in 1 : vector<2x1x64xf32>, vector<2x15x64xf32> -> vector<2x16x64xf32>
    %5 = vector.extract_strided_slice %0 {offsets = [0, 1, 0], sizes = [2, 15, 64], strides = [1, 1, 1]} : vector<2x16x64xf32> to vector<2x15x64xf32>
    %6 = tpu.concatenate %5, %2 in 1 : vector<2x15x64xf32>, vector<2x1x64xf32> -> vector<2x16x64xf32>
    %7 = vector.shape_cast %4 : vector<2x16x64xf32> to vector<32x64xf32>
    %c0_3 = arith.constant 0 : index
    %c0_4 = arith.constant 0 : index
    %c0_5 = arith.constant 0 : index
    %8 = vector.load %arg2[%c0_3, %c0_4, %c0_5] : memref<3x64x128xf32, #tpu.memory_space<vmem>>, vector<1x64x128xf32>
    %9 = vector.shape_cast %8 : vector<1x64x128xf32> to vector<64x128xf32>
    %cst_6 = arith.constant dense<0.000000e+00> : vector<32x128xf32>
    %10 = tpu.matmul %7, %9, %cst_6 {dimension_numbers = #tpu.dot_dimension_numbers<[1], [0], [0], [1], [0, 0, 1, 1], [], []>} : vector<32x64xf32>, vector<64x128xf32>, vector<32x128xf32> -> vector<32x128xf32>
    %11 = vector.shape_cast %0 : vector<2x16x64xf32> to vector<32x64xf32>
    %c1 = arith.constant 1 : index
    %c0_7 = arith.constant 0 : index
    %c0_8 = arith.constant 0 : index
    %12 = vector.load %arg2[%c1, %c0_7, %c0_8] : memref<3x64x128xf32, #tpu.memory_space<vmem>>, vector<1x64x128xf32>
    %13 = vector.shape_cast %12 : vector<1x64x128xf32> to vector<64x128xf32>
    %cst_9 = arith.constant dense<0.000000e+00> : vector<32x128xf32>
    %14 = tpu.matmul %11, %13, %cst_9 {dimension_numbers = #tpu.dot_dimension_numbers<[1], [0], [0], [1], [0, 0, 1, 1], [], []>} : vector<32x64xf32>, vector<64x128xf32>, vector<32x128xf32> -> vector<32x128xf32>
    %15 = arith.addf %10, %14 : vector<32x128xf32>
    %16 = vector.shape_cast %6 : vector<2x16x64xf32> to vector<32x64xf32>
    %c2 = arith.constant 2 : index
    %c0_10 = arith.constant 0 : index
    %c0_11 = arith.constant 0 : index
    %17 = vector.load %arg2[%c2, %c0_10, %c0_11] : memref<3x64x128xf32, #tpu.memory_space<vmem>>, vector<1x64x128xf32>
    %18 = vector.shape_cast %17 : vector<1x64x128xf32> to vector<64x128xf32>
    %cst_12 = arith.constant dense<0.000000e+00> : vector<32x128xf32>
    %19 = tpu.matmul %16, %18, %cst_12 {dimension_numbers = #tpu.dot_dimension_numbers<[1], [0], [0], [1], [0, 0, 1, 1], [], []>} : vector<32x64xf32>, vector<64x128xf32>, vector<32x128xf32> -> vector<32x128xf32>
    %20 = arith.addf %15, %19 : vector<32x128xf32>
    %21 = vector.shape_cast %20 : vector<32x128xf32> to vector<2x16x128xf32>
    %c0_13 = arith.constant 0 : index
    %c0_14 = arith.constant 0 : index
    %c0_15 = arith.constant 0 : index
    %22 = vector.load %arg3[%c0_13, %c0_14, %c0_15] : memref<2x16x128xf32, #tpu.memory_space<vmem>>, vector<2x16x128xf32>
    tpu.vector_store %arg3[%c0_13, %c0_14, %c0_15], %21 {strides = array<i32>} : memref<2x16x128xf32, #tpu.memory_space<vmem>>, vector<2x16x128xf32>,
    %cst_16 = arith.constant dense<0.000000e+00> : vector<128xf32>
    %23 = vector.multi_reduction <add>, %20, %cst_16 [0] : vector<32x128xf32> to vector<128xf32>
    %24 = vector.shape_cast %23 : vector<128xf32> to vector<1x1x128xf32>
    %c0_17 = arith.constant 0 : index
    %c0_18 = arith.constant 0 : index
    %c0_19 = arith.constant 0 : index
    %25 = vector.load %arg4[%c0_17, %c0_18, %c0_19] : memref<1x1x128xf32, #tpu.memory_space<vmem>>, vector<1x1x128xf32>
    tpu.vector_store %arg4[%c0_17, %c0_18, %c0_19], %24 {strides = array<i32>} : memref<1x1x128xf32, #tpu.memory_space<vmem>>, vector<1x1x128xf32>,
    %26 = arith.mulf %20, %20 : vector<32x128xf32>
    %cst_20 = arith.constant dense<0.000000e+00> : vector<128xf32>
    %27 = vector.multi_reduction <add>, %26, %cst_20 [0] : vector<32x128xf32> to vector<128xf32>
    %28 = vector.shape_cast %27 : vector<128xf32> to vector<1x1x128xf32>
    %c0_21 = arith.constant 0 : index
    %c0_22 = arith.constant 0 : index
    %c0_23 = arith.constant 0 : index
    %29 = vector.load %arg5[%c0_21, %c0_22, %c0_23] : memref<1x1x128xf32, #tpu.memory_space<vmem>>, vector<1x1x128xf32>
    tpu.vector_store %arg5[%c0_21, %c0_22, %c0_23], %28 {strides = array<i32>} : memref<1x1x128xf32, #tpu.memory_space<vmem>>, vector<1x1x128xf32>,
    return
  }
  func.func @transform_0(%arg0: i32) -> (i32, i32, i32) {
    %c0_i32 = arith.constant 0 : i32
    %c0_i32_0 = arith.constant 0 : i32
    %c0_i32_1 = arith.constant 0 : i32
    return %arg0, %c0_i32, %c0_i32_0 : i32, i32, i32
  }
  func.func @transform_1(%arg0: i32) -> (i32, i32, i32) {
    %c0_i32 = arith.constant 0 : i32
    %c0_i32_0 = arith.constant 0 : i32
    %c0_i32_1 = arith.constant 0 : i32
    %c0_i32_2 = arith.constant 0 : i32
    return %c0_i32, %c0_i32_0, %c0_i32_1 : i32, i32, i32
  }
  func.func @transform_2(%arg0: i32) -> (i32, i32, i32) {
    %c0_i32 = arith.constant 0 : i32
    %c0_i32_0 = arith.constant 0 : i32
    %c0_i32_1 = arith.constant 0 : i32
    return %arg0, %c0_i32, %c0_i32_0 : i32, i32, i32
  }
  func.func @transform_3(%arg0: i32) -> (i32, i32, i32) {
    %c0_i32 = arith.constant 0 : i32
    %c0_i32_0 = arith.constant 0 : i32
    %c0_i32_1 = arith.constant 0 : i32
    return %arg0, %c0_i32, %c0_i32_0 : i32, i32, i32
  }
  func.func @transform_4(%arg0: i32) -> (i32, i32, i32) {
    %c0_i32 = arith.constant 0 : i32
    %c0_i32_0 = arith.constant 0 : i32
    %c0_i32_1 = arith.constant 0 : i32
    return %arg0, %c0_i32, %c0_i32_0 : i32, i32, i32
  }
}

</mosaic_0001>

<llo_original>
// kernel: tpu_custom_call.1
$region0: #{tpu_custom_call.1}
  #allocation0 [shape = 'u32[]', space=smem, size = 0x4, offset = 0x4, fixed_abs, tag = 'smem constant byte address 0x4 - core index']
  #allocation1 [shape = 'u32[144,128]{1,0:T(1,128)}', space=vmem, size = 0x12000, scoped, tag = 'internal scratch']
  %s0 = inlined_call_operand.hbm [shape: f32[2,16,64], index: 0, kind: input, shape index: {}]
  %s1 = inlined_call_operand.hbm [shape: f32[3,64,128], index: 1, kind: input, shape index: {}]
  %s2 = inlined_call_operand.hbm [shape: f32[2,16,128], index: 2, kind: output, shape index: {0}]
  %s3 = inlined_call_operand.hbm [shape: f32[1,1,128], index: 3, kind: output, shape index: {1}]
  %s4 = inlined_call_operand.hbm [shape: f32[1,1,128], index: 4, kind: output, shape index: {2}]
  %5 = xla_tuple %s2, %s3, %s4
  %s6 = sld [smem:[#allocation0]]
  $region42: #{tpu_custom_call.1} parent=0
    _
  %s8 = ssub.s32 1, %s6
  %s9 = scalar_select 0, %s8, %s6
  $region1: #{tpu_custom_call.1} parent=0
    #allocation2 [shape = 'u8[16384]{0}', space=vmem, size = 0x4000, scoped, tag = 'input window, operand 0, single buffered']
    #allocation3 [shape = 's32[1]{0}', space=sflag, size = 0x4, scoped, tag = 'scoped memory for tpu_custom_call.1']
    #allocation4 [shape = 's32[1]{0}', space=sflag, size = 0x4, scoped, tag = 'scoped memory for tpu_custom_call.1']
    #allocation5 [shape = 'u8[98304]{0}', space=vmem, size = 0x18000, scoped, tag = 'input window, operand 1, single buffered']
    #allocation6 [shape = 's32[1]{0}', space=sflag, size = 0x4, scoped, tag = 'scoped memory for tpu_custom_call.1']
    #allocation7 [shape = 'u8[16384]{0}', space=vmem, size = 0x4000, scoped, tag = 'output window, operand 0, single buffered']
    #allocation8 [shape = 'u8[512]{0}', space=vmem, size = 0x400, scoped, tag = 'output window, operand 1, single buffered']
    #allocation9 [shape = 's32[1]{0}', space=sflag, size = 0x4, scoped, tag = 'scoped memory for tpu_custom_call.1']
    #allocation10 [shape = 'u8[512]{0}', space=vmem, size = 0x400, scoped, tag = 'output window, operand 2, single buffered']
    %10 = vsyncpa [#allocation3], 0
    %11 = vsyncpa [#allocation6], 0
    %12 = vsyncpa [#allocation4], 0
    %13 = vsyncpa [#allocation9], 0
    // Predicated region
    $region2: #{tpu_custom_call.1} parent=1 // pred_check
      _
    $region3: #{tpu_custom_call.1} parent=1 // pred_check_branch
      %15 = sbr.rel (0) target = $region5
    $region4: #{tpu_custom_call.1} parent=1 // pred_region
      %s17 = ssub.s32 512, 512
      %18 = vsyncadd [#allocation3], %s17
      %s19 = sshll.u32 [#allocation2], 4
      %s20 = int_to_ptr.vmem [resolvable:$true] %s19
      %25 = dma.hbm_to_vmem [thread:$0]  %s0, 512, %s20, [#allocation3], 128, 128, 8
    $region5: #{tpu_custom_call.1} parent=1 // pred_fallthru
      _
    // Predicated region
    $region6: #{tpu_custom_call.1} parent=1 // pred_check
      _
    $region7: #{tpu_custom_call.1} parent=1 // pred_check_branch
      %27 = sbr.rel (0) target = $region9
    $region8: #{tpu_custom_call.1} parent=1 // pred_region
      %s29 = ssub.s32 3072, 3072
      %30 = vsyncadd [#allocation6], %s29
      %s31 = sshll.u32 [#allocation5], 4
      %s32 = int_to_ptr.vmem [resolvable:$true] %s31
      %37 = dma.hbm_to_vmem [thread:$0]  %s1, 3072, %s32, [#allocation6], 128, 128, 8
    $region9: #{tpu_custom_call.1} parent=1 // pred_fallthru
      _
    // Predicated region
    $region10: #{tpu_custom_call.1} parent=1 // pred_check
      _
    $region11: #{tpu_custom_call.1} parent=1 // pred_check_branch
      %39 = sbr.rel (0) target = $region13
    $region12: #{tpu_custom_call.1} parent=1 // pred_region
      %40 = dma.done [#allocation3], 512
    $region13: #{tpu_custom_call.1} parent=1 // pred_fallthru
      _
    // Predicated region
    $region14: #{tpu_custom_call.1} parent=1 // pred_check
      _
    $region15: #{tpu_custom_call.1} parent=1 // pred_check_branch
      %42 = sbr.rel (0) target = $region17
    $region16: #{tpu_custom_call.1} parent=1 // pred_region
      %43 = dma.done [#allocation6], 3072
    $region17: #{tpu_custom_call.1} parent=1 // pred_fallthru
      _
    %v44 = vld [vmem:[#allocation2] sm:$0xff]
    %v45 = vld [vmem:[#allocation2 + $0x8] sm:$0xff]
    %v46 = vld [vmem:[#allocation2 + $0x10] sm:$0xff]
    %v47 = vld [vmem:[#allocation2 + $0x18] sm:$0xff]
    %vm52 = vcmask 1040384
    %v53 = vrot.slane %v44, 7
    %v54 = vrot.slane %v45, 7
    %v55 = vsel %vm52, %v53, %v54
    %v56 = vrot.slane %v46, 7
    %v57 = vrot.slane %v47, 7
    %v58 = vsel %vm52, %v56, %v57
    %v61 = vsel %vm52, 0.0, %v53
    %v62 = vsel %vm52, 0.0, %v56
    %vm63 = vcmask 1046528
    %v64 = vrot.slane %v44, 1
    %v65 = vrot.slane %v45, 1
    %v66 = vsel %vm63, %v64, %v65
    %v67 = vrot.slane %v46, 1
    %v68 = vrot.slane %v47, 1
    %v69 = vsel %vm63, %v67, %v68
    %v72 = vsel %vm63, %v65, 0.0
    %v73 = vsel %vm63, %v68, 0.0
    %v74 = vld [vmem:[#allocation5] sm:$0xff]
    %v75 = vld [vmem:[#allocation5 + $0x8] sm:$0xff]
    %v76 = vld [vmem:[#allocation5 + $0x10] sm:$0xff]
    %v77 = vld [vmem:[#allocation5 + $0x18] sm:$0xff]
    %v78 = vld [vmem:[#allocation5 + $0x20] sm:$0xff]
    %v79 = vld [vmem:[#allocation5 + $0x28] sm:$0xff]
    %v80 = vld [vmem:[#allocation5 + $0x30] sm:$0xff]
    %v81 = vld [vmem:[#allocation5 + $0x38] sm:$0xff]
    %s82 = scalar_lea.vmem [#allocation5], 64
    %v83 = vld [vmem:[%s82] sm:$0xff]
    %v84 = vld [vmem:[%s82 + $0x8] sm:$0xff]
    %v85 = vld [vmem:[%s82 + $0x10] sm:$0xff]
    %v86 = vld [vmem:[%s82 + $0x18] sm:$0xff]
    %v87 = vld [vmem:[%s82 + $0x20] sm:$0xff]
    %v88 = vld [vmem:[%s82 + $0x28] sm:$0xff]
    %v89 = vld [vmem:[%s82 + $0x30] sm:$0xff]
    %v90 = vld [vmem:[%s82 + $0x38] sm:$0xff]
    %vm91 = vcmask 523264
    %v92 = vsel %vm91, %v44, 0
    %v94 = vsel %vm91, %v45, 0
    %v96 = vsel %vm91, %v46, 0
    %v98 = vsel %vm91, %v47, 0
    %100 = vmatprep.subr.mxu0 0.0
    %101 = vmatpush1.msra.mxu0 %v83
    %102 = vmatprep.subr.mxu0 0.0
    %103 = vmatpush1.msra.mxu0 %v84
    %104 = vmatprep.subr.mxu0 0.0
    %105 = vmatpush1.msra.mxu0 %v85
    %106 = vmatprep.subr.mxu0 0.0
    %107 = vmatpush1.msra.mxu0 %v86
    %108 = vmatprep.subr.mxu0 0.0
    %109 = vmatpush1.msra.mxu0 %v87
    %110 = vmatprep.subr.mxu0 0.0
    %111 = vmatpush1.msra.mxu0 %v88
    %112 = vmatprep.subr.mxu0 0.0
    %113 = vmatpush1.msra.mxu0 %v89
    %114 = vmatprep.subr.mxu0 0.0
    %115 = vmatpush1.msra.mxu0 %v90
    %116 = vmatprep.subr.mxu0 0.0
    %117 = vmatpush1.msra.mxu0 0.0
    %118 = vmatprep.subr.mxu0 0.0
    %119 = vmatpush1.msra.mxu0 0.0
    %120 = vmatprep.subr.mxu0 0.0
    %121 = vmatpush1.msra.mxu0 0.0
    %122 = vmatprep.subr.mxu0 0.0
    %123 = vmatpush1.msra.mxu0 0.0
    %124 = vmatprep.subr.mxu0 0.0
    %125 = vmatpush1.msra.mxu0 0.0
    %126 = vmatprep.subr.mxu0 0.0
    %127 = vmatpush1.msra.mxu0 0.0
    %128 = vmatprep.subr.mxu0 0.0
    %129 = vmatpush1.msra.mxu0 0.0
    %130 = vmatprep.subr.mxu0 0.0
    %131 = vmatpush1.msra.mxu0 0.0
    %132 = vmatprep.subr.mxu0 0.0
    %133 = vmatpush1.msra.mxu0 0.0
    %134 = vmatprep.subr.mxu0 0.0
    %135 = vmatpush1.msra.mxu0 0.0
    %136 = vmatprep.subr.mxu0 0.0
    %137 = vmatpush1.msra.mxu0 0.0
    %138 = vmatprep.subr.mxu0 0.0
    %139 = vmatpush1.msra.mxu0 0.0
    %140 = vmatprep.subr.mxu0 0.0
    %141 = vmatpush1.msra.mxu0 0.0
    %142 = vmatprep.subr.mxu0 0.0
    %143 = vmatpush1.msra.mxu0 0.0
    %144 = vmatprep.subr.mxu0 0.0
    %145 = vmatpush1.msra.mxu0 0.0
    %146 = vmatprep.subr.mxu0 0.0
    %147 = vmatpush1.msra.mxu0 0.0
    %148 = vmatprep.subr.mxu0 0.0
    %149 = vmatpush1.msra.mxu0 0.0
    %150 = vmatprep.subr.mxu0 0.0
    %151 = vmatpush1.msra.mxu0 0.0
    %152 = vmatprep.subr.mxu0 0.0
    %153 = vmatpush1.msra.mxu0 0.0
    %154 = vmatprep.subr.mxu0 0.0
    %155 = vmatpush1.msra.mxu0 0.0
    %156 = vmatprep.subr.mxu0 0.0
    %157 = vmatpush1.msra.mxu0 0.0
    %158 = vmatprep.subr.mxu0 0.0
    %159 = vmatpush1.msra.mxu0 0.0
    %160 = vmatprep.subr.mxu0 0.0
    %161 = vmatpush1.msra.mxu0 0.0
    %162 = vmatprep.subr.mxu0 0.0
    %163 = vmatpush1.msra.mxu0 0.0
    %164 = vmatprep.mubr.f32.mxu0 0.0
    %165 = vmatmul.mubr.f32.gmra.mrb[0].mxu0 %v92
    %v166 = vpop.f32.mrb[0].mxu0
    %v167 = vadd.f32 0.0, %v166
    %v168 = vpop.f32.mrb[0].mxu0
    %169 = vmatprep.mubr.f32.mxu0 0.0
    %170 = vmatmul.mubr.f32.gmra.mrb[0].mxu0 %v94
    %v171 = vpop.f32.mrb[0].mxu0
    %v172 = vadd.f32 0.0, %v171
    %v173 = vpop.f32.mrb[0].mxu0
    %174 = vmatprep.mubr.f32.mxu0 0.0
    %175 = vmatmul.mubr.f32.gmra.mrb[0].mxu0 %v96
    %v176 = vpop.f32.mrb[0].mxu0
    %v177 = vadd.f32 0.0, %v176
    %v178 = vpop.f32.mrb[0].mxu0
    %179 = vmatprep.mubr.f32.mxu0 0.0
    %180 = vmatmul.mubr.f32.gmra.mrb[0].mxu0 %v98
    %v181 = vpop.f32.mrb[0].mxu0
    %v182 = vadd.f32 0.0, %v181
    %v183 = vpop.f32.mrb[0].mxu0
    %184 = vdwg.mxu0
    %v186 = vsel %vm91, %v61, 0
    %v188 = vsel %vm91, %v55, 0
    %v191 = vsel %vm91, %v62, 0
    %v193 = vsel %vm91, %v58, 0
    %195 = vmatprep.subr.mxu0 0.0
    %196 = vmatpush1.msra.mxu0 %v74
    %197 = vmatprep.subr.mxu0 0.0
    %198 = vmatpush1.msra.mxu0 %v75
    %199 = vmatprep.subr.mxu0 0.0
    %200 = vmatpush1.msra.mxu0 %v76
    %201 = vmatprep.subr.mxu0 0.0
    %202 = vmatpush1.msra.mxu0 %v77
    %203 = vmatprep.subr.mxu0 0.0
    %204 = vmatpush1.msra.mxu0 %v78
    %205 = vmatprep.subr.mxu0 0.0
    %206 = vmatpush1.msra.mxu0 %v79
    %207 = vmatprep.subr.mxu0 0.0
    %208 = vmatpush1.msra.mxu0 %v80
    %209 = vmatprep.subr.mxu0 0.0
    %210 = vmatpush1.msra.mxu0 %v81
    %211 = vmatprep.subr.mxu0 0.0
    %212 = vmatpush1.msra.mxu0 0.0
    %213 = vmatprep.subr.mxu0 0.0
    %214 = vmatpush1.msra.mxu0 0.0
    %215 = vmatprep.subr.mxu0 0.0
    %216 = vmatpush1.msra.mxu0 0.0
    %217 = vmatprep.subr.mxu0 0.0
    %218 = vmatpush1.msra.mxu0 0.0
    %219 = vmatprep.subr.mxu0 0.0
    %220 = vmatpush1.msra.mxu0 0.0
    %221 = vmatprep.subr.mxu0 0.0
    %222 = vmatpush1.msra.mxu0 0.0
    %223 = vmatprep.subr.mxu0 0.0
    %224 = vmatpush1.msra.mxu0 0.0
    %225 = vmatprep.subr.mxu0 0.0
    %226 = vmatpush1.msra.mxu0 0.0
    %227 = vmatprep.subr.mxu0 0.0
    %228 = vmatpush1.msra.mxu0 0.0
    %229 = vmatprep.subr.mxu0 0.0
    %230 = vmatpush1.msra.mxu0 0.0
    %231 = vmatprep.subr.mxu0 0.0
    %232 = vmatpush1.msra.mxu0 0.0
    %233 = vmatprep.subr.mxu0 0.0
    %234 = vmatpush1.msra.mxu0 0.0
    %235 = vmatprep.subr.mxu0 0.0
    %236 = vmatpush1.msra.mxu0 0.0
    %237 = vmatprep.subr.mxu0 0.0
    %238 = vmatpush1.msra.mxu0 0.0
    %239 = vmatprep.subr.mxu0 0.0
    %240 = vmatpush1.msra.mxu0 0.0
    %241 = vmatprep.subr.mxu0 0.0
    %242 = vmatpush1.msra.mxu0 0.0
    %243 = vmatprep.subr.mxu0 0.0
    %244 = vmatpush1.msra.mxu0 0.0
    %245 = vmatprep.subr.mxu0 0.0
    %246 = vmatpush1.msra.mxu0 0.0
    %247 = vmatprep.subr.mxu0 0.0
    %248 = vmatpush1.msra.mxu0 0.0
    %249 = vmatprep.subr.mxu0 0.0
    %250 = vmatpush1.msra.mxu0 0.0
    %251 = vmatprep.subr.mxu0 0.0
    %252 = vmatpush1.msra.mxu0 0.0
    %253 = vmatprep.subr.mxu0 0.0
    %254 = vmatpush1.msra.mxu0 0.0
    %255 = vmatprep.subr.mxu0 0.0
    %256 = vmatpush1.msra.mxu0 0.0
    %257 = vmatprep.subr.mxu0 0.0
    %258 = vmatpush1.msra.mxu0 0.0
    %259 = vmatprep.mubr.f32.mxu0 0.0
    %260 = vmatmul.mubr.f32.gmra.mrb[0].mxu0 %v186
    %v261 = vpop.f32.mrb[0].mxu0
    %v262 = vadd.f32 %v167, %v261
    %v263 = vpop.f32.mrb[0].mxu0
    %264 = vmatprep.mubr.f32.mxu0 0.0
    %265 = vmatmul.mubr.f32.gmra.mrb[0].mxu0 %v188
    %v266 = vpop.f32.mrb[0].mxu0
    %v267 = vadd.f32 %v172, %v266
    %v268 = vpop.f32.mrb[0].mxu0
    %269 = vmatprep.mubr.f32.mxu0 0.0
    %270 = vmatmul.mubr.f32.gmra.mrb[0].mxu0 %v191
    %v271 = vpop.f32.mrb[0].mxu0
    %v272 = vadd.f32 %v177, %v271
    %v273 = vpop.f32.mrb[0].mxu0
    %274 = vmatprep.mubr.f32.mxu0 0.0
    %275 = vmatmul.mubr.f32.gmra.mrb[0].mxu0 %v193
    %v276 = vpop.f32.mrb[0].mxu0
    %v277 = vadd.f32 %v182, %v276
    %v278 = vpop.f32.mrb[0].mxu0
    %279 = vdwg.mxu0
    %s280 = scalar_lea.vmem [#allocation5], 128
    %v281 = vld [vmem:[%s280] sm:$0xff]
    %v282 = vld [vmem:[%s280 + $0x8] sm:$0xff]
    %v283 = vld [vmem:[%s280 + $0x10] sm:$0xff]
    %v284 = vld [vmem:[%s280 + $0x18] sm:$0xff]
    %v285 = vld [vmem:[%s280 + $0x20] sm:$0xff]
    %v286 = vld [vmem:[%s280 + $0x28] sm:$0xff]
    %v287 = vld [vmem:[%s280 + $0x30] sm:$0xff]
    %v288 = vld [vmem:[%s280 + $0x38] sm:$0xff]
    %v289 = vsel %vm91, %v66, 0
    %v292 = vsel %vm91, %v72, 0
    %v294 = vsel %vm91, %v69, 0
    %v297 = vsel %vm91, %v73, 0
    %299 = vmatprep.subr.mxu0 0.0
    %300 = vmatpush1.msra.mxu0 %v281
    %301 = vmatprep.subr.mxu0 0.0
    %302 = vmatpush1.msra.mxu0 %v282
    %303 = vmatprep.subr.mxu0 0.0
    %304 = vmatpush1.msra.mxu0 %v283
    %305 = vmatprep.subr.mxu0 0.0
    %306 = vmatpush1.msra.mxu0 %v284
    %307 = vmatprep.subr.mxu0 0.0
    %308 = vmatpush1.msra.mxu0 %v285
    %309 = vmatprep.subr.mxu0 0.0
    %310 = vmatpush1.msra.mxu0 %v286
    %311 = vmatprep.subr.mxu0 0.0
    %312 = vmatpush1.msra.mxu0 %v287
    %313 = vmatprep.subr.mxu0 0.0
    %314 = vmatpush1.msra.mxu0 %v288
    %315 = vmatprep.subr.mxu0 0.0
    %316 = vmatpush1.msra.mxu0 0.0
    %317 = vmatprep.subr.mxu0 0.0
    %318 = vmatpush1.msra.mxu0 0.0
    %319 = vmatprep.subr.mxu0 0.0
    %320 = vmatpush1.msra.mxu0 0.0
    %321 = vmatprep.subr.mxu0 0.0
    %322 = vmatpush1.msra.mxu0 0.0
    %323 = vmatprep.subr.mxu0 0.0
    %324 = vmatpush1.msra.mxu0 0.0
    %325 = vmatprep.subr.mxu0 0.0
    %326 = vmatpush1.msra.mxu0 0.0
    %327 = vmatprep.subr.mxu0 0.0
    %328 = vmatpush1.msra.mxu0 0.0
    %329 = vmatprep.subr.mxu0 0.0
    %330 = vmatpush1.msra.mxu0 0.0
    %331 = vmatprep.subr.mxu0 0.0
    %332 = vmatpush1.msra.mxu0 0.0
    %333 = vmatprep.subr.mxu0 0.0
    %334 = vmatpush1.msra.mxu0 0.0
    %335 = vmatprep.subr.mxu0 0.0
    %336 = vmatpush1.msra.mxu0 0.0
    %337 = vmatprep.subr.mxu0 0.0
    %338 = vmatpush1.msra.mxu0 0.0
    %339 = vmatprep.subr.mxu0 0.0
    %340 = vmatpush1.msra.mxu0 0.0
    %341 = vmatprep.subr.mxu0 0.0
    %342 = vmatpush1.msra.mxu0 0.0
    %343 = vmatprep.subr.mxu0 0.0
    %344 = vmatpush1.msra.mxu0 0.0
    %345 = vmatprep.subr.mxu0 0.0
    %346 = vmatpush1.msra.mxu0 0.0
    %347 = vmatprep.subr.mxu0 0.0
    %348 = vmatpush1.msra.mxu0 0.0
    %349 = vmatprep.subr.mxu0 0.0
    %350 = vmatpush1.msra.mxu0 0.0
    %351 = vmatprep.subr.mxu0 0.0
    %352 = vmatpush1.msra.mxu0 0.0
    %353 = vmatprep.subr.mxu0 0.0
    %354 = vmatpush1.msra.mxu0 0.0
    %355 = vmatprep.subr.mxu0 0.0
    %356 = vmatpush1.msra.mxu0 0.0
    %357 = vmatprep.subr.mxu0 0.0
    %358 = vmatpush1.msra.mxu0 0.0
    %359 = vmatprep.subr.mxu0 0.0
    %360 = vmatpush1.msra.mxu0 0.0
    %361 = vmatprep.subr.mxu0 0.0
    %362 = vmatpush1.msra.mxu0 0.0
    %363 = vmatprep.mubr.f32.mxu0 0.0
    %364 = vmatmul.mubr.f32.gmra.mrb[0].mxu0 %v289
    %v365 = vpop.f32.mrb[0].mxu0
    %v366 = vadd.f32 0.0, %v365
    %v367 = vpop.f32.mrb[0].mxu0
    %368 = vmatprep.mubr.f32.mxu0 0.0
    %369 = vmatmul.mubr.f32.gmra.mrb[0].mxu0 %v292
    %v370 = vpop.f32.mrb[0].mxu0
    %v371 = vadd.f32 0.0, %v370
    %v372 = vpop.f32.mrb[0].mxu0
    %373 = vmatprep.mubr.f32.mxu0 0.0
    %374 = vmatmul.mubr.f32.gmra.mrb[0].mxu0 %v294
    %v375 = vpop.f32.mrb[0].mxu0
    %v376 = vadd.f32 0.0, %v375
    %v377 = vpop.f32.mrb[0].mxu0
    %378 = vmatprep.mubr.f32.mxu0 0.0
    %379 = vmatmul.mubr.f32.gmra.mrb[0].mxu0 %v297
    %v380 = vpop.f32.mrb[0].mxu0
    %v381 = vadd.f32 0.0, %v380
    %v382 = vpop.f32.mrb[0].mxu0
    %383 = vdwg.mxu0
    %v384 = vadd.f32 %v262, %v366
    %v385 = vadd.f32 %v267, %v371
    %v386 = vadd.f32 %v272, %v376
    %v387 = vadd.f32 %v277, %v381
    %388 = vst [vmem:[#allocation7] sm:$0xff] %v384
    %389 = vst [vmem:[#allocation7 + $0x8] sm:$0xff] %v385
    %390 = vst [vmem:[#allocation7 + $0x10] sm:$0xff] %v386
    %391 = vst [vmem:[#allocation7 + $0x18] sm:$0xff] %v387
    %v392 = vadd.f32 %v384, %v385
    %v393 = vadd.f32 %v392, %v386
    %v394 = vadd.f32 %v393, %v387
    %v395 = vrot.slane %v394, 4
    %v396 = vadd.f32 %v394, %v395
    %v397 = vrot.slane %v396, 2
    %v398 = vadd.f32 %v396, %v397
    %v399 = vrot.slane %v398, 1
    %v400 = vadd.f32 %v398, %v399
    %401 = vst [vmem:[#allocation8] sm:$0x1] %v400
    %v402 = vmul.f32 %v384, %v384
    %v403 = vmul.f32 %v385, %v385
    %v404 = vmul.f32 %v386, %v386
    %v405 = vmul.f32 %v387, %v387
    %v406 = vadd.f32 %v402, %v403
    %v407 = vadd.f32 %v406, %v404
    %v408 = vadd.f32 %v407, %v405
    %v409 = vrot.slane %v408, 4
    %v410 = vadd.f32 %v408, %v409
    %v411 = vrot.slane %v410, 2
    %v412 = vadd.f32 %v410, %v411
    %v413 = vrot.slane %v412, 1
    %v414 = vadd.f32 %v412, %v413
    %415 = vst [vmem:[#allocation10] sm:$0x1] %v414
    // Predicated region
    $region18: #{tpu_custom_call.1} parent=1 // pred_check
      _
    $region19: #{tpu_custom_call.1} parent=1 // pred_check_branch
      %417 = sbr.rel (0) target = $region21
    $region20: #{tpu_custom_call.1} parent=1 // pred_region
      %s419 = ssub.s32 512, 512
      %420 = vsyncadd [#allocation4], %s419
      %s421 = sshll.u32 [#allocation7], 4
      %s422 = int_to_ptr.vmem [resolvable:$true] %s421
      %427 = dma.vmem_to_hbm [thread:$0]  %s422, 512, %s2, [#allocation4], 128, 128, 8
    $region21: #{tpu_custom_call.1} parent=1 // pred_fallthru
      _
    // Predicated region
    $region22: #{tpu_custom_call.1} parent=1 // pred_check
      _
    $region23: #{tpu_custom_call.1} parent=1 // pred_check_branch
      %429 = sbr.rel (0) target = $region25
    $region24: #{tpu_custom_call.1} parent=1 // pred_region
      %s431 = ssub.s32 16, 16
      %432 = vsyncadd [#allocation9], %s431
      %s434 = sshll.u32 [#allocation8], 4
      %s435 = int_to_ptr.vmem [resolvable:$true] %s434
      %437 = dma.vmem_to_hbm [thread:$0]  %s435, 16, %s3, [#allocation9]
    $region25: #{tpu_custom_call.1} parent=1 // pred_fallthru
      _
    // Predicated region
    $region26: #{tpu_custom_call.1} parent=1 // pred_check
      _
    $region27: #{tpu_custom_call.1} parent=1 // pred_check_branch
      %439 = sbr.rel (0) target = $region29
    $region28: #{tpu_custom_call.1} parent=1 // pred_region
      %s441 = ssub.s32 16, 16
      %442 = vsyncadd [#allocation9], %s441
      %s444 = sshll.u32 [#allocation10], 4
      %s445 = int_to_ptr.vmem [resolvable:$true] %s444
      %447 = dma.vmem_to_hbm [thread:$0]  %s445, 16, %s4, [#allocation9]
    $region29: #{tpu_custom_call.1} parent=1 // pred_fallthru
      _
    // Predicated region
    $region30: #{tpu_custom_call.1} parent=1 // pred_check
      _
    $region31: #{tpu_custom_call.1} parent=1 // pred_check_branch
      %449 = sbr.rel (0) target = $region33
    $region32: #{tpu_custom_call.1} parent=1 // pred_region
      %450 = dma.done [#allocation4], 512
    $region33: #{tpu_custom_call.1} parent=1 // pred_fallthru
      _
    // Predicated region
    $region34: #{tpu_custom_call.1} parent=1 // pred_check
      _
    $region35: #{tpu_custom_call.1} parent=1 // pred_check_branch
      %452 = sbr.rel (0) target = $region37
    $region36: #{tpu_custom_call.1} parent=1 // pred_region
      %453 = dma.done [#allocation9], 16
    $region37: #{tpu_custom_call.1} parent=1 // pred_fallthru
      _
    // Predicated region
    $region38: #{tpu_custom_call.1} parent=1 // pred_check
      _
    $region39: #{tpu_custom_call.1} parent=1 // pred_check_branch
      %455 = sbr.rel (0) target = $region41
    $region40: #{tpu_custom_call.1} parent=1 // pred_region
      %456 = dma.done [#allocation9], 16
    $region41: #{tpu_custom_call.1} parent=1 // pred_fallthru
      _
    %457 = vsyncpa [#allocation3], 1
    %458 = vsyncpa [#allocation6], 1
    %459 = vsyncpa [#allocation4], 1
    %460 = vsyncpa [#allocation9], 1

</llo_original>
